<compile_context>
chip_gen: v6e
topology: v6e:2x2x1
jax: 0.10.0
libtpu: 0.0.40
codegen_flags: <defaults>
</compile_context>

<pallas_src>
import functools
import math

import jax
import jax.numpy as jnp
import numpy as np
from jax import lax
from jax.experimental import pallas as pl
from jax.experimental.pallas import tpu as pltpu

EPS_NORM = 1e-08          # cosine_sim denominator clamp (moved onto each norm factor)
EPS_COS = 1e-05           # cosine clamp before the (implicit) acos
PI_CLAMP = 3.14159        # upper theta clamp used by the reference
# TODO(synk): the reference's lower theta clamp (1e-5) is a no-op for m=0.4 with
# the cosine clip above; it would only matter for m ~ 0, which is not exercised.
# TODO(synk): the 1e-8 clamp now applies to |x| and |w| individually instead of
# their product -- identical except for degenerate zero-norm rows.


def _round_up(v: int, m: int) -> int:
    return ((v + m - 1) // m) * m


def _vmem_capacity_bytes() -> int:
    """Per-core VMEM capacity; conservative fallback if the query is unavailable."""
    try:
        cap = getattr(pltpu.get_tpu_info(), "vmem_capacity_bytes", None)
        if cap:
            return int(cap)
    except Exception:
        pass
    return 64 * 1024 * 1024   # v7x has 64 MiB per TensorCore; v5e/v6e have 128 MiB


def _plan_batch_tile(batch, d_pad, tc, dot_itemsize, out_itemsize, block_b, vmem_cap):
    """Pick the largest batch tile (multiple of 8) whose pipeline fits VMEM."""
    tb = _round_up(min(block_b, _round_up(batch, 8)), 8)
    budget = int(vmem_cap * 0.7)

    def footprint(tb_):
        per_step = (tb_ * d_pad * dot_itemsize        # x tile
                    + d_pad * tc * dot_itemsize       # W.T tile
                    + tc * 4 + 2 * tb_ * 4            # inv_wn, inv_xn_s, label
                    + tb_ * tc * out_itemsize)        # output tile
        # 2x for Pallas double-buffering + a few fp32 full-tile temporaries.
        return 2 * per_step + 3 * tb_ * tc * 4

    while footprint(tb) > budget and tb > 8:
        tb = max(8, _round_up(tb // 2, 8))
    # TODO(synk): if D is huge (D_pad*TC*itemsize*2 alone blows the budget), add a
    # K grid axis marked "arbitrary" with an fp32 VMEM accumulator instead.
    return tb, footprint(tb)


def _arcface_kernel(x_ref, wt_ref, inv_wn_ref, inv_xn_s_ref, label_ref, o_ref, *,
                    s, cos_m, sin_m, cos_thresh, cos_at_clamp, block_c):
    # s * cosine for the whole (TB, TC) tile: MXU matmul in the input dtype
    # (bf16 by default) with fp32 accumulation, then two rank-1 scalings.
    ip = jnp.dot(x_ref[...], wt_ref[...],
                 preferred_element_type=jnp.float32)            # (TB, TC) f32
    sc = ip * inv_xn_s_ref[...] * inv_wn_ref[...]               # == s * cosine
    # Reference clips the cosine to [-1+1e-5, 1-1e-5] before acos; for non-label
    # columns that clipped value *is* the output cosine, so clip the scaled tile.
    sc = jnp.clip(sc, -s * (1.0 - EPS_COS), s * (1.0 - EPS_COS))

    # Label-column mask.  The iota is loop-invariant (the class-tile origin is
    # folded into the scalar label instead), so it can be hoisted out of the grid.
    local_label = label_ref[...] - pl.program_id(0) * block_c   # (TB, 1) i32
    is_label = lax.broadcasted_iota(jnp.int32, sc.shape, 1) == local_label

    # Margin only on the label column: gather it per row (masked XLU reduce),
    # run the clip/trig fold on a (TB, 1) vector, then a single final select.
    #   cos(acos(cc) + m) = cc*cos(m) - sqrt(1 - cc^2)*sin(m)
    #   theta upper clamp: acos(cc)+m > 3.14159  <=>  cc < cos(3.14159 - m)
    cc = jnp.sum(jnp.where(is_label, sc, 0.0), axis=1, keepdims=True) * (1.0 / s)
    sin_theta = jnp.sqrt(jnp.maximum(1.0 - cc * cc, 0.0))
    cos_margin = cc * cos_m - sin_theta * sin_m
    cos_margin = jnp.where(cc < cos_thresh, cos_at_clamp, cos_margin)

    # logits = s * (cosine + d_theta) == s * cos(theta_clamped).
    o_ref[...] = jnp.where(is_label, s * cos_margin, sc).astype(o_ref.dtype)


def prepare_arcface_weight(weight, *, block_c=512, dot_dtype=jnp.bfloat16):
    """One-time weight layout work (hoist out of the per-step forward call):
    pad, transpose to (D, C) so the class dim is the lane axis, cast to the MXU
    dtype, and precompute the per-class inverse norms in fp32."""
    C, D = weight.shape
    d_pad = _round_up(D, 128)
    tc = min(block_c, _round_up(C, 128))
    c_pad = _round_up(C, tc)

    wf = weight.astype(jnp.float32)
    wt_p = jnp.pad(wf.T, ((0, d_pad - D), (0, c_pad - C))).astype(dot_dtype)
    inv_wn = 1.0 / jnp.maximum(jnp.sqrt(jnp.sum(wf * wf, axis=1)), EPS_NORM)
    inv_wn_p = jnp.pad(inv_wn, (0, c_pad - C),
                       constant_values=1.0).reshape(1, c_pad)
    return dict(wt=wt_p, inv_wn=inv_wn_p, out_features=C, in_features=D,
                tc=tc, c_pad=c_pad, d_pad=d_pad, dot_dtype=dot_dtype)


def arcface_forward(x, weight=None, label=None, *, prepared=None, s=30.0, m=0.4,
                    block_b=512, block_c=512, dot_dtype=jnp.bfloat16,
                    out_dtype=jnp.float32):
    """ArcFace logits = s * (cos + d_theta), tiled over (classes, batch)."""
    if prepared is None:
        prepared = prepare_arcface_weight(weight, block_c=block_c,
                                          dot_dtype=dot_dtype)
    dot_dtype = prepared["dot_dtype"]
    C, D = prepared["out_features"], prepared["in_features"]
    tc, c_pad, d_pad = prepared["tc"], prepared["c_pad"], prepared["d_pad"]

    B, D2 = x.shape
    assert D2 == D, "x must be (batch, in_features)"

    dot_item = jnp.dtype(dot_dtype).itemsize
    out_item = jnp.dtype(out_dtype).itemsize
    vmem_cap = _vmem_capacity_bytes()
    tb, fp = _plan_batch_tile(B, d_pad, tc, dot_item, out_item, block_b, vmem_cap)
    b_pad = _round_up(B, tb)

    # Row norms once per call in fp32 (not once per class tile), with s folded in
    # and inverted so the kernel's cosine is a pure rank-1 scaling of the matmul.
    xf = x.astype(jnp.float32)
    inv_xn_s = s / jnp.maximum(jnp.sqrt(jnp.sum(xf * xf, axis=1)), EPS_NORM)
    inv_xn_s_p = jnp.pad(inv_xn_s, (0, b_pad - B),
                         constant_values=float(s)).reshape(b_pad, 1)

    x_p = xf if (b_pad == B and d_pad == D) else jnp.pad(
        xf, ((0, b_pad - B), (0, d_pad - D)))
    x_p = x_p.astype(dot_dtype)                    # halve the x HBM stream (bf16)

    label_p = jnp.full((b_pad, 1), -1, jnp.int32).at[:B, 0].set(
        label.astype(jnp.int32))

    kernel = functools.partial(
        _arcface_kernel,
        s=float(s),
        cos_m=math.cos(m),
        sin_m=math.sin(m),
        cos_thresh=math.cos(PI_CLAMP - m),
        cos_at_clamp=math.cos(PI_CLAMP),
        block_c=tc,
    )

    # Class axis leads so v7x megacore shards disjoint halves of W across its two
    # TensorCores; the W.T block stays resident across the inner batch axis.
    grid = (c_pad // tc, b_pad // tb)

    vmem_limit = int(min(max(fp * 3 // 2, 32 * 1024 * 1024), vmem_cap))

    cost = pl.CostEstimate(
        flops=2 * b_pad * c_pad * d_pad + 6 * b_pad * c_pad,
        transcendentals=b_pad * (c_pad // tc),
        bytes_accessed=(b_pad * d_pad * dot_item * (c_pad // tc)
                        + d_pad * c_pad * dot_item
                        + c_pad * 4 + 2 * b_pad * 4
                        + b_pad * c_pad * out_item),
    )

    # TODO(synk): on v5e, if the W.T DMA is still exposed after the larger batch
    # tile, add pipeline_mode=pl.Buffered(3) on in_specs[1].
    out = pl.pallas_call(
        kernel,
        out_shape=jax.ShapeDtypeStruct((b_pad, c_pad), out_dtype),
        grid=grid,
        in_specs=[
            pl.BlockSpec((tb, d_pad), lambda cj, bi: (bi, 0)),   # x tile
            pl.BlockSpec((d_pad, tc), lambda cj, bi: (0, cj)),   # W.T tile
            pl.BlockSpec((1, tc), lambda cj, bi: (0, cj)),       # 1/|w|
            pl.BlockSpec((tb, 1), lambda cj, bi: (bi, 0)),       # s/|x|
            pl.BlockSpec((tb, 1), lambda cj, bi: (bi, 0)),       # labels
        ],
        out_specs=pl.BlockSpec((tb, tc), lambda cj, bi: (bi, cj)),
        compiler_params=pltpu.CompilerParams(
            dimension_semantics=("parallel", "parallel"),
            vmem_limit_bytes=vmem_limit,
        ),
        cost_estimate=cost,
    )(x_p, prepared["wt"], prepared["inv_wn"], inv_xn_s_p, label_p)

    # Skip the extra HBM round trip when no padding was added.
    if b_pad == B and c_pad == C:
        return out
    return out[:B, :C]


def arcface_reference(x, weight, label, *, s=30.0, m=0.4):
    # Pure-JAX fp32 reference mirroring the torch module (uses arccos/cos).
    ip = x @ weight.T
    w1 = jnp.linalg.norm(x, axis=1)
    w2 = jnp.linalg.norm(weight, axis=1)
    cosine = ip / jnp.maximum(jnp.outer(w1, w2), EPS_NORM)
    theta = jnp.arccos(jnp.clip(cosine, -1.0 + EPS_COS, 1.0 - EPS_COS))
    col = jnp.arange(weight.shape[0])[None, :]
    theta = theta + jnp.where(col == label[:, None], m, 0.0)
    theta = jnp.clip(theta, 1e-05, PI_CLAMP)
    d_theta = jnp.cos(theta) - cosine
    return s * (cosine + d_theta)


if __name__ == "__main__":
    B, IN_FEATURES, OUT_FEATURES = 8, 32, 16

    key = jax.random.PRNGKey(0)
    kx, kw, kl = jax.random.split(key, 3)

    x = jax.random.normal(kx, (B, IN_FEATURES), dtype=jnp.float32)

    # xavier_uniform_ init: U(-bound, bound), bound = sqrt(6 / (fan_in + fan_out))
    bound = math.sqrt(6.0 / (IN_FEATURES + OUT_FEATURES))
    weight = jax.random.uniform(
        kw, (OUT_FEATURES, IN_FEATURES), dtype=jnp.float32,
        minval=-bound, maxval=bound,
    )

    label = jax.random.randint(kl, (B,), 0, OUT_FEATURES, dtype=jnp.int32)

    ref = arcface_reference(x, weight, label)

    # Exact-precision path (fp32 MXU), weights prepared once outside the call.
    prep_f32 = prepare_arcface_weight(weight, dot_dtype=jnp.float32)
    logits_f32 = jax.block_until_ready(
        arcface_forward(x, weight, label, prepared=prep_f32))
    np.testing.assert_allclose(np.asarray(logits_f32), np.asarray(ref),
                               atol=1e-3, rtol=1e-4)

    # Production path (bf16 MXU inputs, fp32 accumulation) -- loose sanity check.
    prep_bf16 = prepare_arcface_weight(weight, dot_dtype=jnp.bfloat16)
    logits_bf16 = jax.block_until_ready(
        arcface_forward(x, weight, label, prepared=prep_bf16))
    np.testing.assert_allclose(np.asarray(logits_bf16), np.asarray(ref),
                               atol=0.5, rtol=0.05)

    print("KERNEL_OK")
</pallas_src>

<mosaic_0001>
module attributes {stable_mosaic.version = 11 : i64} {
  func.func @_arcface_kernel(%arg0: i32, %arg1: i32, %arg2: memref<8x128xf32, #tpu.memory_space<vmem>>, %arg3: memref<128x128xf32, #tpu.memory_space<vmem>>, %arg4: memref<1x128xf32, #tpu.memory_space<vmem>>, %arg5: memref<8x1xf32, #tpu.memory_space<vmem>>, %arg6: memref<8x1xi32, #tpu.memory_space<vmem>>, %arg7: memref<8x128xf32, #tpu.memory_space<vmem>>) attributes {dimension_semantics = [#tpu.dimension_semantics<parallel>, #tpu.dimension_semantics<parallel>], iteration_bounds = array<i64: 1, 1>, scalar_prefetch = 0 : i64, scratch_operands = 0 : i64, tpu.core_type = #tpu.core_type<tc>, window_params = [{transform_indices = @transform_0, window_bounds = array<i64: 8, 128>}, {transform_indices = @transform_1, window_bounds = array<i64: 128, 128>}, {transform_indices = @transform_2, window_bounds = array<i64: 1, 128>}, {transform_indices = @transform_3, window_bounds = array<i64: 8, 1>}, {transform_indices = @transform_4, window_bounds = array<i64: 8, 1>}, {transform_indices = @transform_5, window_bounds = array<i64: 8, 128>}]} {
    %c0 = arith.constant 0 : index
    %c0_0 = arith.constant 0 : index
    %0 = vector.load %arg2[%c0, %c0_0] : memref<8x128xf32, #tpu.memory_space<vmem>>, vector<8x128xf32>
    %c0_1 = arith.constant 0 : index
    %c0_2 = arith.constant 0 : index
    %1 = vector.load %arg3[%c0_1, %c0_2] : memref<128x128xf32, #tpu.memory_space<vmem>>, vector<128x128xf32>
    %cst = arith.constant dense<0.000000e+00> : vector<8x128xf32>
    %2 = tpu.matmul %0, %1, %cst {dimension_numbers = #tpu.dot_dimension_numbers<[1], [0], [0], [1], [0, 0, 1, 1], [], []>} : vector<8x128xf32>, vector<128x128xf32>, vector<8x128xf32> -> vector<8x128xf32>
    %c0_3 = arith.constant 0 : index
    %c0_4 = arith.constant 0 : index
    %3 = vector.load %arg5[%c0_3, %c0_4] : memref<8x1xf32, #tpu.memory_space<vmem>>, vector<8x1xf32>
    %4 = vector.broadcast %3 : vector<8x1xf32> to vector<8x128xf32>
    %5 = arith.mulf %2, %4 : vector<8x128xf32>
    %c0_5 = arith.constant 0 : index
    %c0_6 = arith.constant 0 : index
    %6 = vector.load %arg4[%c0_5, %c0_6] : memref<1x128xf32, #tpu.memory_space<vmem>>, vector<1x128xf32>
    %7 = vector.broadcast %6 : vector<1x128xf32> to vector<8x128xf32>
    %8 = arith.mulf %5, %7 : vector<8x128xf32>
    %cst_7 = arith.constant -2.999970e+01 : f32
    %cst_8 = arith.constant 2.999970e+01 : f32
    %9 = vector.broadcast %cst_7 : f32 to vector<8x128xf32>
    %10 = arith.maximumf %9, %8 : vector<8x128xf32>
    %11 = vector.broadcast %cst_8 : f32 to vector<8x128xf32>
    %12 = arith.minimumf %11, %10 : vector<8x128xf32>
    %c0_9 = arith.constant 0 : index
    %c0_10 = arith.constant 0 : index
    %13 = vector.load %arg6[%c0_9, %c0_10] : memref<8x1xi32, #tpu.memory_space<vmem>>, vector<8x1xi32>
    %c128_i32 = arith.constant 128 : i32
    %14 = arith.muli %arg0, %c128_i32 : i32
    %15 = vector.broadcast %14 : i32 to vector<8x1xi32>
    %16 = arith.subi %13, %15 : vector<8x1xi32>
    %17 = tpu.iota {dimensions = array<i32: 1>} : vector<8x128xi32>
    %18 = vector.broadcast %16 : vector<8x1xi32> to vector<8x128xi32>
    %19 = arith.cmpi eq, %17, %18 : vector<8x128xi32>
    %cst_11 = arith.constant 0.000000e+00 : f32
    %20 = vector.broadcast %cst_11 : f32 to vector<8x128xf32>
    %21 = arith.select %19, %12, %20 : vector<8x128xi1>, vector<8x128xf32>
    %cst_12 = arith.constant dense<0.000000e+00> : vector<8xf32>
    %22 = vector.multi_reduction <add>, %21, %cst_12 [1] : vector<8x128xf32> to vector<8xf32>
    %23 = vector.shape_cast %22 : vector<8xf32> to vector<8x1xf32>
    %cst_13 = arith.constant 0.0333333351 : f32
    %24 = vector.broadcast %cst_13 : f32 to vector<8x1xf32>
    %25 = arith.mulf %23, %24 : vector<8x1xf32>
    %26 = arith.mulf %25, %25 : vector<8x1xf32>
    %cst_14 = arith.constant 1.000000e+00 : f32
    %27 = vector.broadcast %cst_14 : f32 to vector<8x1xf32>
    %28 = arith.subf %27, %26 : vector<8x1xf32>
    %cst_15 = arith.constant 0.000000e+00 : f32
    %29 = vector.broadcast %cst_15 : f32 to vector<8x1xf32>
    %30 = arith.maximumf %28, %29 : vector<8x1xf32>
    %31 = math.sqrt %30 : vector<8x1xf32>
    %cst_16 = arith.constant 0.921060979 : f32
    %32 = vector.broadcast %cst_16 : f32 to vector<8x1xf32>
    %33 = arith.mulf %25, %32 : vector<8x1xf32>
    %cst_17 = arith.constant 0.389418334 : f32
    %34 = vector.broadcast %cst_17 : f32 to vector<8x1xf32>
    %35 = arith.mulf %31, %34 : vector<8x1xf32>
    %36 = arith.subf %33, %35 : vector<8x1xf32>
    %cst_18 = arith.constant -0.921059966 : f32
    %37 = vector.broadcast %cst_18 : f32 to vector<8x1xf32>
    %38 = arith.cmpf olt, %25, %37 : vector<8x1xf32>
    %cst_19 = arith.constant -1.000000e+00 : f32
    %39 = vector.broadcast %cst_19 : f32 to vector<8x1xf32>
    %40 = arith.select %38, %39, %36 : vector<8x1xi1>, vector<8x1xf32>
    %cst_20 = arith.constant 3.000000e+01 : f32
    %41 = vector.broadcast %cst_20 : f32 to vector<8x1xf32>
    %42 = arith.mulf %41, %40 : vector<8x1xf32>
    %43 = vector.shape_cast %42 : vector<8x1xf32> to vector<8x1xf32>
    %44 = vector.broadcast %43 : vector<8x1xf32> to vector<8x128xf32>
    %45 = arith.select %19, %44, %12 : vector<8x128xi1>, vector<8x128xf32>
    %c0_21 = arith.constant 0 : index
    %c0_22 = arith.constant 0 : index
    %46 = vector.load %arg7[%c0_21, %c0_22] : memref<8x128xf32, #tpu.memory_space<vmem>>, vector<8x128xf32>
    tpu.vector_store %arg7[%c0_21, %c0_22], %45 {strides = array<i32>} : memref<8x128xf32, #tpu.memory_space<vmem>>, vector<8x128xf32>,
    return
  }
  func.func @transform_0(%arg0: i32, %arg1: i32) -> (i32, i32) {
    %c0_i32 = arith.constant 0 : i32
    %c0_i32_0 = arith.constant 0 : i32
    return %arg1, %c0_i32 : i32, i32
  }
  func.func @transform_1(%arg0: i32, %arg1: i32) -> (i32, i32) {
    %c0_i32 = arith.constant 0 : i32
    %c0_i32_0 = arith.constant 0 : i32
    return %c0_i32, %arg0 : i32, i32
  }
  func.func @transform_2(%arg0: i32, %arg1: i32) -> (i32, i32) {
    %c0_i32 = arith.constant 0 : i32
    %c0_i32_0 = arith.constant 0 : i32
    return %c0_i32, %arg0 : i32, i32
  }
  func.func @transform_3(%arg0: i32, %arg1: i32) -> (i32, i32) {
    %c0_i32 = arith.constant 0 : i32
    %c0_i32_0 = arith.constant 0 : i32
    return %arg1, %c0_i32 : i32, i32
  }
  func.func @transform_4(%arg0: i32, %arg1: i32) -> (i32, i32) {
    %c0_i32 = arith.constant 0 : i32
    %c0_i32_0 = arith.constant 0 : i32
    return %arg1, %c0_i32 : i32, i32
  }
  func.func @transform_5(%arg0: i32, %arg1: i32) -> (i32, i32) {
    %c0_i32 = arith.constant 0 : i32
    return %arg1, %arg0 : i32, i32
  }
}

</mosaic_0001>

<llo_original>
// kernel: tpu_custom_call.1
$region0: #{tpu_custom_call.1}
  #allocation0 [shape = 'u32[]', space=smem, size = 0x4, offset = 0x4, fixed_abs, tag = 'smem constant byte address 0x4 - core index']
  #allocation1 [shape = 'u32[144,128]{1,0:T(1,128)}', space=vmem, size = 0x12000, scoped, tag = 'internal scratch']
  %s0 = inlined_call_operand.vmem [shape: f32[8,128], index: 0, kind: input, shape index: {}]
  %s1 = inlined_call_operand.hbm [shape: f32[128,128], index: 1, kind: input, shape index: {}]
  %s2 = inlined_call_operand.vmem [shape: f32[1,128], index: 2, kind: input, shape index: {}]
  %s3 = inlined_call_operand.vmem [shape: f32[8,1], index: 3, kind: input, shape index: {}]
  %s4 = inlined_call_operand.vmem [shape: s32[8,1], index: 4, kind: input, shape index: {}]
  %s5 = inlined_call_operand.hbm [shape: f32[8,128], index: 5, kind: output, shape index: {}]
  %s6 = sld [smem:[#allocation0]]
  $region34: #{tpu_custom_call.1} parent=0
    _
  %s8 = ssub.s32 1, %s6
  %s9 = scalar_select 0, %s8, %s6
  $region1: #{tpu_custom_call.1} parent=0
    #allocation2 [shape = 'u8[65536]{0}', space=vmem, size = 0x10000, scoped, tag = 'input window, operand 1, single buffered']
    #allocation3 [shape = 's32[1]{0}', space=sflag, size = 0x4, scoped, tag = 'scoped memory for tpu_custom_call.1']
    #allocation4 [shape = 's32[1]{0}', space=sflag, size = 0x4, scoped, tag = 'scoped memory for tpu_custom_call.1']
    #allocation5 [shape = 'u8[4096]{0}', space=vmem, size = 0x1000, scoped, tag = 'output window, operand 0, single buffered']
    %10 = vsyncpa [#allocation3], 0
    %11 = vsyncpa [#allocation4], 0
    // Predicated region
    $region2: #{tpu_custom_call.1} parent=1 // pred_check
      _
    $region3: #{tpu_custom_call.1} parent=1 // pred_check_branch
      %13 = sbr.rel (0) target = $region5
    $region4: #{tpu_custom_call.1} parent=1 // pred_region
      _
    $region5: #{tpu_custom_call.1} parent=1 // pred_fallthru
      _
    // Predicated region
    $region6: #{tpu_custom_call.1} parent=1 // pred_check
      _
    $region7: #{tpu_custom_call.1} parent=1 // pred_check_branch
      %15 = sbr.rel (0) target = $region9
    $region8: #{tpu_custom_call.1} parent=1 // pred_region
      %s17 = ssub.s32 2048, 2048
      %18 = vsyncadd [#allocation3], %s17
      %s19 = sshll.u32 [#allocation2], 4
      %s20 = int_to_ptr.vmem [resolvable:$true] %s19
      %25 = dma.hbm_to_vmem [thread:$0]  %s1, 2048, %s20, [#allocation3], 128, 128, 8
    $region9: #{tpu_custom_call.1} parent=1 // pred_fallthru
      _
    // Predicated region
    $region10: #{tpu_custom_call.1} parent=1 // pred_check
      _
    $region11: #{tpu_custom_call.1} parent=1 // pred_check_branch
      %27 = sbr.rel (0) target = $region13
    $region12: #{tpu_custom_call.1} parent=1 // pred_region
      _
    $region13: #{tpu_custom_call.1} parent=1 // pred_fallthru
      _
    // Predicated region
    $region14: #{tpu_custom_call.1} parent=1 // pred_check
      _
    $region15: #{tpu_custom_call.1} parent=1 // pred_check_branch
      %29 = sbr.rel (0) target = $region17
    $region16: #{tpu_custom_call.1} parent=1 // pred_region
      _
    $region17: #{tpu_custom_call.1} parent=1 // pred_fallthru
      _
    // Predicated region
    $region18: #{tpu_custom_call.1} parent=1 // pred_check
      _
    $region19: #{tpu_custom_call.1} parent=1 // pred_check_branch
      %31 = sbr.rel (0) target = $region21
    $region20: #{tpu_custom_call.1} parent=1 // pred_region
      _
    $region21: #{tpu_custom_call.1} parent=1 // pred_fallthru
      _
    // Predicated region
    $region22: #{tpu_custom_call.1} parent=1 // pred_check
      _
    $region23: #{tpu_custom_call.1} parent=1 // pred_check_branch
      %33 = sbr.rel (0) target = $region25
    $region24: #{tpu_custom_call.1} parent=1 // pred_region
      %34 = dma.done [#allocation3], 2048
    $region25: #{tpu_custom_call.1} parent=1 // pred_fallthru
      _
    %v35 = vld [vmem:[%s0] sm:$0xff]
    %v36 = vld [vmem:[#allocation2] sm:$0xff]
    %v37 = vld [vmem:[#allocation2 + $0x8] sm:$0xff]
    %v38 = vld [vmem:[#allocation2 + $0x10] sm:$0xff]
    %v39 = vld [vmem:[#allocation2 + $0x18] sm:$0xff]
    %v40 = vld [vmem:[#allocation2 + $0x20] sm:$0xff]
    %v41 = vld [vmem:[#allocation2 + $0x28] sm:$0xff]
    %v42 = vld [vmem:[#allocation2 + $0x30] sm:$0xff]
    %v43 = vld [vmem:[#allocation2 + $0x38] sm:$0xff]
    %v44 = vld [vmem:[#allocation2 + $0x40] sm:$0xff]
    %v45 = vld [vmem:[#allocation2 + $0x48] sm:$0xff]
    %v46 = vld [vmem:[#allocation2 + $0x50] sm:$0xff]
    %v47 = vld [vmem:[#allocation2 + $0x58] sm:$0xff]
    %v48 = vld [vmem:[#allocation2 + $0x60] sm:$0xff]
    %v49 = vld [vmem:[#allocation2 + $0x68] sm:$0xff]
    %v50 = vld [vmem:[#allocation2 + $0x70] sm:$0xff]
    %v51 = vld [vmem:[#allocation2 + $0x78] sm:$0xff]
    %52 = vmatprep.subr.mxu0 0.0
    %53 = vmatpush1.msra.mxu0 %v51
    %54 = vmatprep.subr.mxu0 0.0
    %55 = vmatpush1.msra.mxu0 %v50
    %56 = vmatprep.subr.mxu0 0.0
    %57 = vmatpush1.msra.mxu0 %v49
    %58 = vmatprep.subr.mxu0 0.0
    %59 = vmatpush1.msra.mxu0 %v48
    %60 = vmatprep.subr.mxu0 0.0
    %61 = vmatpush1.msra.mxu0 %v47
    %62 = vmatprep.subr.mxu0 0.0
    %63 = vmatpush1.msra.mxu0 %v46
    %64 = vmatprep.subr.mxu0 0.0
    %65 = vmatpush1.msra.mxu0 %v45
    %66 = vmatprep.subr.mxu0 0.0
    %67 = vmatpush1.msra.mxu0 %v44
    %68 = vmatprep.subr.mxu0 0.0
    %69 = vmatpush1.msra.mxu0 %v43
    %70 = vmatprep.subr.mxu0 0.0
    %71 = vmatpush1.msra.mxu0 %v42
    %72 = vmatprep.subr.mxu0 0.0
    %73 = vmatpush1.msra.mxu0 %v41
    %74 = vmatprep.subr.mxu0 0.0
    %75 = vmatpush1.msra.mxu0 %v40
    %76 = vmatprep.subr.mxu0 0.0
    %77 = vmatpush1.msra.mxu0 %v39
    %78 = vmatprep.subr.mxu0 0.0
    %79 = vmatpush1.msra.mxu0 %v38
    %80 = vmatprep.subr.mxu0 0.0
    %81 = vmatpush1.msra.mxu0 %v37
    %82 = vmatprep.subr.mxu0 0.0
    %83 = vmatpush1.msra.mxu0 %v36
    %84 = vmatprep.subr.mxu0 0.0
    %85 = vmatpush2.msra.mxu0 0.0
    %86 = vmatprep.subr.mxu0 0.0
    %87 = vmatpush2.msra.mxu0 0.0
    %88 = vmatprep.subr.mxu0 0.0
    %89 = vmatpush2.msra.mxu0 0.0
    %90 = vmatprep.subr.mxu0 0.0
    %91 = vmatpush2.msra.mxu0 0.0
    %92 = vmatprep.subr.mxu0 0.0
    %93 = vmatpush2.msra.mxu0 0.0
    %94 = vmatprep.subr.mxu0 0.0
    %95 = vmatpush2.msra.mxu0 0.0
    %96 = vmatprep.subr.mxu0 0.0
    %97 = vmatpush2.msra.mxu0 0.0
    %98 = vmatprep.subr.mxu0 0.0
    %99 = vmatpush2.msra.mxu0 0.0
    %100 = vmatprep.subr.mxu0 0.0
    %101 = vmatpush2.msra.mxu0 0.0
    %102 = vmatprep.subr.mxu0 0.0
    %103 = vmatpush2.msra.mxu0 0.0
    %104 = vmatprep.subr.mxu0 0.0
    %105 = vmatpush2.msra.mxu0 0.0
    %106 = vmatprep.subr.mxu0 0.0
    %107 = vmatpush2.msra.mxu0 0.0
    %108 = vmatprep.subr.mxu0 0.0
    %109 = vmatpush2.msra.mxu0 0.0
    %110 = vmatprep.subr.mxu0 0.0
    %111 = vmatpush2.msra.mxu0 0.0
    %112 = vmatprep.subr.mxu0 0.0
    %113 = vmatpush2.msra.mxu0 0.0
    %114 = vmatprep.subr.mxu0 0.0
    %115 = vmatpush2.msra.mxu0 0.0
    %116 = vmatprep.mubr.f32.mxu0 0.0
    %117 = vmatmul.mubr.f32.gmra.mxu0 %v35
    %v118 = vpop.f32.mrf.mxu0
    %v119 = vadd.f32 0.0, %v118
    %v120 = vpop.f32.mrf.mxu0
    %121 = vdwg.mxu0
    %v122 = vld [vmem:[%s3] sm:$0xff]
    %124 = vset.pattern.permute.xlu0 0
    %125 = vperm.xlu0 %124, %v122
    %v126 = vpop.permute.xlu0 %125
    %v128 = vmul.f32 %v119, %v126
    %v129 = vld [vmem:[%s2] sm:$0x1]
    %v131 = vlaneseq
    %v132 = vshrl.u32 %v131, 7
    %v133 = vsub.s32 0, %v132
    %v134 = vrot.slane %v129, %v133
    %v136 = vmul.f32 %v128, %v134
    %v137 = vmax.f32 %v136, -29.9997
    %v138 = vmin.f32 %v137, 29.9997
    %v139 = vld [vmem:[%s4] sm:$0xff]
    %s140 = smul.u32 0, 128
    %v141 = vstv %s140
    %v142 = vsub.s32 %v139, %v141
    %v143 = vlaneseq
    %v144 = vand.u32 %v143, 127
    %145 = vset.pattern.permute.xlu0 0
    %146 = vperm.xlu0 %145, %v142
    %v147 = vpop.permute.xlu0 %146
    %vm148 = vcmp.eq.s32.totalorder %v144, %v147
    %v149 = vsel %vm148, %v138, 0.0
    %150 = vadd.xlane.f32.xlu0 %v149
    %v151 = vpop.xlane.xlu0 %150
    %v152 = vmul.f32 %v151, 0.033333335
    %v153 = vmul.f32 %v152, %v152
    %v154 = vsub.f32 1.0, %v153
    %v155 = vmax.f32 %v154, 0.0
    %v156 = vrsqrt.pop %v155
    %v157 = vmul.f32 %v155, %v156
    %vm158 = vcmp.eq.f32.partialorder %v155, inf
    %v159 = vsel %vm158, %v155, %v157
    %vm160 = vcmp.eq.f32.partialorder %v155, 0.0
    %v161 = vand.u32 %v155, 2147483648
    %v162 = vsel %vm160, %v161, %v159
    %v163 = vmul.f32 %v152, 0.921061
    %v164 = vmul.f32 %v162, 0.38941833
    %v165 = vsub.f32 %v163, %v164
    %vm166 = vcmp.lt.f32.partialorder %v152, -0.92105997
    %v167 = vsel %vm166, -1.0, %v165
    %v168 = vmul.f32 %v167, 30.0
    %v169 = vsel %vm148, %v168, %v138
    %170 = vst [vmem:[#allocation5] sm:$0xff] %v169
    // Predicated region
    $region26: #{tpu_custom_call.1} parent=1 // pred_check
      _
    $region27: #{tpu_custom_call.1} parent=1 // pred_check_branch
      %172 = sbr.rel (0) target = $region29
    $region28: #{tpu_custom_call.1} parent=1 // pred_region
      %s174 = ssub.s32 128, 128
      %175 = vsyncadd [#allocation4], %s174
      %s177 = sshll.u32 [#allocation5], 4
      %s178 = int_to_ptr.vmem [resolvable:$true] %s177
      %180 = dma.vmem_to_hbm [thread:$0]  %s178, 128, %s5, [#allocation4]
    $region29: #{tpu_custom_call.1} parent=1 // pred_fallthru
      _
    // Predicated region
    $region30: #{tpu_custom_call.1} parent=1 // pred_check
      _
    $region31: #{tpu_custom_call.1} parent=1 // pred_check_branch
      %182 = sbr.rel (0) target = $region33
    $region32: #{tpu_custom_call.1} parent=1 // pred_region
      %183 = dma.done [#allocation4], 128
    $region33: #{tpu_custom_call.1} parent=1 // pred_fallthru
      _
    %184 = vsyncpa [#allocation3], 1
    %185 = vsyncpa [#allocation4], 1

</llo_original>
